<compile_context>
chip_gen: v7x
topology: tpu7x:2x2x1
jax: 0.10.0
libtpu: 0.0.40
codegen_flags: <defaults>
</compile_context>

<pallas_src>
import functools
import math

import jax
import jax.numpy as jnp
from jax import lax
from jax.experimental import pallas as pl
from jax.experimental.pallas import tpu as pltpu


def _epilogue(y, a, seed_u32, row0, col0, *, drop_prob, training, out_features):
    """PReLU + inverted dropout on an f32 tile.

    row0 / col0 are uint32 offsets of this tile inside the *logical*
    (batch, out_features) output, so the dropout mask is independent of the
    tile configuration (fast path and tiled path drop the same elements).
    """
    y = jnp.where(y >= 0.0, y, a * y)                    # PReLU (shared scalar a)
    if not (training and drop_prob > 0.0):
        return y
    rows, cols = y.shape
    r = lax.broadcasted_iota(jnp.int32, (rows, cols), 0).astype(jnp.uint32) + row0
    c = lax.broadcasted_iota(jnp.int32, (rows, cols), 1).astype(jnp.uint32) + col0
    idx = r * jnp.uint32(out_features) + c               # uint32 math (no int32 wrap)
    # 2-round fmix32-style mixer: cheap VALU epilogue, stateless, reproducible.
    h = idx ^ seed_u32
    h = h * jnp.uint32(0x9E3779B1)
    h = h ^ (h >> jnp.uint32(16))
    h = h * jnp.uint32(0x85EBCA6B)
    h = h ^ (h >> jnp.uint32(16))
    thresh = jnp.uint32(min(int(drop_prob * (2.0 ** 32)), 2 ** 32 - 1))
    scale = jnp.float32(1.0 / (1.0 - drop_prob))
    # Fold the keep-scale into a single select: y * (keep ? scale : 0).
    return y * jnp.where(h >= thresh, scale, jnp.float32(0.0))


def _hb_kernel_pinned(a_ref, seed_ref, x_ref, wt_ref, b_ref, o_ref, *,
                      drop_prob, training, out_features, tm):
    """Fast path: whole weight/bias pinned in VMEM, 1-D grid over batch tiles."""
    i = pl.program_id(0)                                 # top-level binding only
    y = jnp.dot(x_ref[...].astype(jnp.bfloat16),         # bf16 operands, f32 acc
                wt_ref[...].astype(jnp.bfloat16),
                preferred_element_type=jnp.float32) + b_ref[...]
    y = _epilogue(y, a_ref[0], seed_ref[0].astype(jnp.uint32),
                  (i * tm).astype(jnp.uint32), jnp.uint32(0),
                  drop_prob=drop_prob, training=training,
                  out_features=out_features)
    o_ref[...] = y.astype(o_ref.dtype)


def _hb_kernel_tiled(a_ref, seed_ref, x_ref, wt_ref, b_ref, o_ref, *,
                     drop_prob, training, out_features, tm, tn):
    """General path: (M, N, K) grid, K innermost, accumulate into o_ref (f32)."""
    # Bind grid queries at top level; pl.when bodies only close over the values.
    i = pl.program_id(0)
    j = pl.program_id(1)
    k = pl.program_id(2)
    nk = pl.num_programs(2)

    @pl.when(k == 0)
    def _init():
        # Seed the resident output block with the broadcast bias -> no bias add
        # in the finalize, no accumulator scratch at all.
        o_ref[...] = jnp.broadcast_to(b_ref[...], o_ref.shape)

    o_ref[...] += jnp.dot(x_ref[...].astype(jnp.bfloat16),
                          wt_ref[...].astype(jnp.bfloat16),
                          preferred_element_type=jnp.float32)

    @pl.when(k == nk - 1)
    def _finalize():
        o_ref[...] = _epilogue(o_ref[...], a_ref[0],
                               seed_ref[0].astype(jnp.uint32),
                               (i * tm).astype(jnp.uint32),
                               (j * tn).astype(jnp.uint32),
                               drop_prob=drop_prob, training=training,
                               out_features=out_features)


def hidden_block(x, weight_t, bias, prelu_a, *, drop_prob, seed, training=True,
                 tm=256, tn=512, tk=512,
                 fast_path_vmem_bytes=18 * 1024 * 1024):
    """Dropout(PReLU(x @ weight_t + bias)) — forward of the torch HiddenBlock.

    x:        (B, in_features) f32 (or bf16).
    weight_t: (in_features, out_features) — torch Linear weight transposed ONCE
              at init (torch stores (out_features, in_features)).
    bias:     (out_features,) f32.
    prelu_a:  scalar PReLU slope (nn.PReLU() default: one shared parameter).
    Returns (B, out_features) f32.
    """
    B, in_f = x.shape
    kf, out_f = weight_t.shape
    assert kf == in_f and bias.shape == (out_f,)

    a_arr = jnp.asarray(prelu_a, jnp.float32).reshape(1)
    seed_arr = jnp.asarray(seed, jnp.int32).reshape(1)
    bias2d = bias.astype(jnp.float32).reshape(1, out_f)

    def _bytes(shape, dtype):
        return math.prod(shape) * jnp.dtype(dtype).itemsize

    # ---- batch (M) tile: multiple of 8 (or the full B), >=2 tiles when possible
    # so v7x's 2 TensorCores both get a parallel grid point.
    if B <= 8:
        tm_eff = B
    elif B <= tm:
        tm_eff = max(8, ((B + 1) // 2 + 7) // 8 * 8)
    else:
        tm_eff = max(8, (tm // 8) * 8)
    m_tiles = pl.cdiv(B, tm_eff)

    common_params = pltpu.CompilerParams(
        dimension_semantics=("parallel",) if True else None,  # overridden below
        vmem_limit_bytes=32 * 1024 * 1024)

    # ---- fast path: pin the whole weight (constant index_map) in VMEM --------
    vmem_est = 2 * (_bytes(weight_t.shape, weight_t.dtype)
                    + _bytes((tm_eff, in_f), x.dtype)
                    + _bytes((tm_eff, out_f), jnp.float32)) \
        + _bytes((1, out_f), jnp.float32)
    if vmem_est <= fast_path_vmem_bytes:
        kernel = functools.partial(_hb_kernel_pinned,
                                   drop_prob=float(drop_prob),
                                   training=bool(training),
                                   out_features=out_f, tm=tm_eff)
        return pl.pallas_call(
            kernel,
            out_shape=jax.ShapeDtypeStruct((B, out_f), jnp.float32),
            grid_spec=pltpu.PrefetchScalarGridSpec(
                num_scalar_prefetch=0,
                grid=(m_tiles,),
                in_specs=[
                    pl.BlockSpec(memory_space=pltpu.MemorySpace.SMEM),  # PReLU a
                    pl.BlockSpec(memory_space=pltpu.MemorySpace.SMEM),  # seed
                    pl.BlockSpec((tm_eff, in_f), lambda i: (i, 0)),     # x rows
                    pl.BlockSpec((in_f, out_f), lambda i: (0, 0)),      # W^T pinned
                    pl.BlockSpec((1, out_f), lambda i: (0, 0)),         # bias pinned
                ],
                out_specs=pl.BlockSpec((tm_eff, out_f), lambda i: (i, 0)),
            ),
            compiler_params=pltpu.CompilerParams(
                dimension_semantics=("parallel",),
                vmem_limit_bytes=32 * 1024 * 1024),
        )(a_arr, seed_arr, x, weight_t, bias2d)

    # ---- general tiled path: (M, N, K) grid, K innermost ----------------------
    tn_eff = tn if out_f > tn else out_f
    tk_eff = tk if in_f > tk else in_f
    if out_f > tn:
        assert tn % 128 == 0, "tn must be a multiple of 128"
    if in_f > tk:
        assert tk % 128 == 0, "tk must be a multiple of 128"

    # Only a ragged K tail needs real zero padding (it feeds the accumulation);
    # ragged M / N edges are handled by masked edge blocks.  In a real model,
    # pad the weight once at init instead of per call.
    Kp = pl.cdiv(in_f, tk_eff) * tk_eff
    if Kp != in_f:
        x_in = jnp.pad(x, ((0, 0), (0, Kp - in_f)))
        wt_in = jnp.pad(weight_t, ((0, Kp - in_f), (0, 0)))
    else:
        x_in, wt_in = x, weight_t

    grid = (m_tiles, pl.cdiv(out_f, tn_eff), Kp // tk_eff)
    kernel = functools.partial(_hb_kernel_tiled,
                               drop_prob=float(drop_prob),
                               training=bool(training),
                               out_features=out_f, tm=tm_eff, tn=tn_eff)
    return pl.pallas_call(
        kernel,
        out_shape=jax.ShapeDtypeStruct((B, out_f), jnp.float32),
        grid_spec=pltpu.PrefetchScalarGridSpec(
            num_scalar_prefetch=0,
            grid=grid,
            in_specs=[
                pl.BlockSpec(memory_space=pltpu.MemorySpace.SMEM),        # PReLU a
                pl.BlockSpec(memory_space=pltpu.MemorySpace.SMEM),        # seed
                pl.BlockSpec((tm_eff, tk_eff), lambda i, j, k: (i, k)),   # x tile
                pl.BlockSpec((tk_eff, tn_eff), lambda i, j, k: (k, j)),   # W^T tile
                pl.BlockSpec((1, tn_eff), lambda i, j, k: (0, j)),        # bias tile
            ],
            out_specs=pl.BlockSpec((tm_eff, tn_eff), lambda i, j, k: (i, j)),
        ),
        compiler_params=pltpu.CompilerParams(
            dimension_semantics=("parallel", "parallel", "arbitrary"),
            vmem_limit_bytes=32 * 1024 * 1024),
    )(a_arr, seed_arr, x_in, wt_in, bias2d)


if __name__ == "__main__":
    B, IN_F, OUT_F = 64, 256, 256
    DROP_PROB = 0.2
    SEED = 1234

    key = jax.random.PRNGKey(0)
    kx, kw, kb = jax.random.split(key, 3)

    x = jax.random.normal(kx, (B, IN_F), dtype=jnp.float32)

    # Deterministic torch-style Linear init (weight in native (out, in) layout).
    bound = 1.0 / math.sqrt(IN_F)
    weight = jax.random.uniform(kw, (OUT_F, IN_F), jnp.float32, -bound, bound)
    bias = jax.random.uniform(kb, (OUT_F,), jnp.float32, -bound, bound)
    prelu_a = jnp.float32(0.25)                 # nn.PReLU() default init

    # One-time (init-style) transpose to the MXU-friendly (in, out) layout.
    weight_t = jnp.asarray(weight.T)

    out = hidden_block(x, weight_t, bias, prelu_a,
                       drop_prob=DROP_PROB, seed=SEED, training=True)
    out = jax.block_until_ready(out)
    assert out.shape == (B, OUT_F) and out.dtype == jnp.float32
    assert bool(jnp.all(jnp.isfinite(out)))

    # Reference with the same bf16-operand / f32-accumulate matmul as the kernel.
    # (Dropout draws come from a stateless counter hash, not torch's RNG stream,
    # so only the Bernoulli(p) keep/scale semantics are checked, not exact bits.)
    ref = jnp.dot(x.astype(jnp.bfloat16), weight_t.astype(jnp.bfloat16),
                  preferred_element_type=jnp.float32) + bias
    ref = jnp.where(ref >= 0.0, ref, prelu_a * ref)

    scale = 1.0 / (1.0 - DROP_PROB)
    kept = out != 0.0
    assert bool(jnp.allclose(jnp.where(kept, out, 0.0),
                             jnp.where(kept, ref * scale, 0.0),
                             rtol=1e-2, atol=1e-2))
    keep_frac = float(jnp.mean(kept.astype(jnp.float32)))
    assert 0.74 < keep_frac < 0.86, keep_frac

    # Eval mode: dropout disabled -> plain Linear + PReLU.
    out_eval = hidden_block(x, weight_t, bias, prelu_a,
                            drop_prob=DROP_PROB, seed=SEED, training=False)
    out_eval = jax.block_until_ready(out_eval)
    assert bool(jnp.allclose(out_eval, ref, rtol=1e-2, atol=1e-2))

    # Force the general (M, N, K) tiled path; the dropout mask is keyed to
    # logical indices, so it must agree with the pinned-weight fast path.
    out_tiled = hidden_block(x, weight_t, bias, prelu_a,
                             drop_prob=DROP_PROB, seed=SEED, training=True,
                             tm=32, tn=128, tk=128, fast_path_vmem_bytes=0)
    out_tiled = jax.block_until_ready(out_tiled)
    assert out_tiled.shape == (B, OUT_F)
    assert bool(jnp.allclose(out_tiled, out, rtol=2e-3, atol=2e-3))

    print("KERNEL_OK")
</pallas_src>

<mosaic_0001>
module attributes {stable_mosaic.version = 11 : i64} {
  func.func @_hb_kernel_pinned(%arg0: i32, %arg1: memref<1xf32, #tpu.memory_space<smem>>, %arg2: memref<1xi32, #tpu.memory_space<smem>>, %arg3: memref<32x256xf32, #tpu.memory_space<vmem>>, %arg4: memref<256x256xf32, #tpu.memory_space<vmem>>, %arg5: memref<1x256xf32, #tpu.memory_space<vmem>>, %arg6: memref<32x256xf32, #tpu.memory_space<vmem>>) attributes {dimension_semantics = [#tpu.dimension_semantics<parallel>], iteration_bounds = array<i64: 2>, scalar_prefetch = 0 : i64, scratch_operands = 0 : i64, tpu.core_type = #tpu.core_type<tc>, window_params = [{transform_indices = @transform_0, window_bounds = array<i64: 1>}, {transform_indices = @transform_1, window_bounds = array<i64: 1>}, {transform_indices = @transform_2, window_bounds = array<i64: 32, 256>}, {pipeline_mode = #tpu.pipeline_mode<synchronous>, transform_indices = @transform_3, window_bounds = array<i64: 256, 256>}, {pipeline_mode = #tpu.pipeline_mode<synchronous>, transform_indices = @transform_4, window_bounds = array<i64: 1, 256>}, {transform_indices = @transform_5, window_bounds = array<i64: 32, 256>}]} {
    %c0 = arith.constant 0 : index
    %c0_0 = arith.constant 0 : index
    %0 = vector.load %arg3[%c0, %c0_0] : memref<32x256xf32, #tpu.memory_space<vmem>>, vector<32x256xf32>
    %1 = arith.truncf %0 : vector<32x256xf32> to vector<32x256xbf16>
    %c0_1 = arith.constant 0 : index
    %c0_2 = arith.constant 0 : index
    %2 = vector.load %arg4[%c0_1, %c0_2] : memref<256x256xf32, #tpu.memory_space<vmem>>, vector<256x256xf32>
    %3 = arith.truncf %2 : vector<256x256xf32> to vector<256x256xbf16>
    %cst = arith.constant dense<0.000000e+00> : vector<32x256xf32>
    %4 = tpu.matmul %1, %3, %cst {dimension_numbers = #tpu.dot_dimension_numbers<[1], [0], [0], [1], [0, 0, 1, 1], [], []>} : vector<32x256xbf16>, vector<256x256xbf16>, vector<32x256xf32> -> vector<32x256xf32>
    %c0_3 = arith.constant 0 : index
    %c0_4 = arith.constant 0 : index
    %5 = vector.load %arg5[%c0_3, %c0_4] : memref<1x256xf32, #tpu.memory_space<vmem>>, vector<1x256xf32>
    %6 = vector.broadcast %5 : vector<1x256xf32> to vector<32x256xf32>
    %7 = arith.addf %4, %6 : vector<32x256xf32>
    %c0_5 = arith.constant 0 : index
    %8 = memref.load %arg1[%c0_5] : memref<1xf32, #tpu.memory_space<smem>>
    %c0_6 = arith.constant 0 : index
    %9 = memref.load %arg2[%c0_6] : memref<1xi32, #tpu.memory_space<smem>>
    %c32_i32 = arith.constant 32 : i32
    %10 = arith.muli %arg0, %c32_i32 : i32
    %cst_7 = arith.constant 0.000000e+00 : f32
    %11 = vector.broadcast %cst_7 : f32 to vector<32x256xf32>
    %12 = arith.cmpf oge, %7, %11 : vector<32x256xf32>
    %13 = vector.broadcast %8 : f32 to vector<32x256xf32>
    %14 = arith.mulf %13, %7 : vector<32x256xf32>
    %15 = arith.select %12, %7, %14 : vector<32x256xi1>, vector<32x256xf32>
    %16 = tpu.iota {dimensions = array<i32: 0>} : vector<32x256xi32>
    %17 = vector.broadcast %10 : i32 to vector<32x256xi32>
    %18 = arith.addi %16, %17 : vector<32x256xi32>
    %19 = tpu.iota {dimensions = array<i32: 1>} : vector<32x256xi32>
    %c0_i32 = arith.constant 0 : i32
    %20 = vector.broadcast %c0_i32 : i32 to vector<32x256xi32>
    %21 = arith.addi %19, %20 : vector<32x256xi32>
    %c256_i32 = arith.constant 256 : i32
    %22 = vector.broadcast %c256_i32 : i32 to vector<32x256xi32>
    %23 = arith.muli %18, %22 : vector<32x256xi32>
    %24 = arith.addi %23, %21 : vector<32x256xi32>
    %25 = vector.broadcast %9 : i32 to vector<32x256xi32>
    %26 = arith.xori %24, %25 : vector<32x256xi32>
    %c-1640531535_i32 = arith.constant -1640531535 : i32
    %27 = vector.broadcast %c-1640531535_i32 : i32 to vector<32x256xi32>
    %28 = arith.muli %26, %27 : vector<32x256xi32>
    %c16_i32 = arith.constant 16 : i32
    %29 = vector.broadcast %c16_i32 : i32 to vector<32x256xi32>
    %30 = arith.shrui %28, %29 : vector<32x256xi32>
    %31 = arith.xori %28, %30 : vector<32x256xi32>
    %c-2048144789_i32 = arith.constant -2048144789 : i32
    %32 = vector.broadcast %c-2048144789_i32 : i32 to vector<32x256xi32>
    %33 = arith.muli %31, %32 : vector<32x256xi32>
    %c16_i32_8 = arith.constant 16 : i32
    %34 = vector.broadcast %c16_i32_8 : i32 to vector<32x256xi32>
    %35 = arith.shrui %33, %34 : vector<32x256xi32>
    %36 = arith.xori %33, %35 : vector<32x256xi32>
    %c858993459_i32 = arith.constant 858993459 : i32
    %37 = vector.broadcast %c858993459_i32 : i32 to vector<32x256xi32>
    %38 = arith.cmpi uge, %36, %37 : vector<32x256xi32>
    %cst_9 = arith.constant 1.250000e+00 : f32
    %cst_10 = arith.constant 0.000000e+00 : f32
    %39 = vector.broadcast %cst_9 : f32 to vector<32x256xf32>
    %40 = vector.broadcast %cst_10 : f32 to vector<32x256xf32>
    %41 = arith.select %38, %39, %40 : vector<32x256xi1>, vector<32x256xf32>
    %42 = arith.mulf %15, %41 : vector<32x256xf32>
    %c0_11 = arith.constant 0 : index
    %c0_12 = arith.constant 0 : index
    %43 = vector.load %arg6[%c0_11, %c0_12] : memref<32x256xf32, #tpu.memory_space<vmem>>, vector<32x256xf32>
    tpu.vector_store %arg6[%c0_11, %c0_12], %42 {strides = array<i32>} : memref<32x256xf32, #tpu.memory_space<vmem>>, vector<32x256xf32>,
    return
  }
  func.func @transform_0(%arg0: i32) -> i32 {
    %c0_i32 = arith.constant 0 : i32
    %c0_i32_0 = arith.constant 0 : i32
    return %c0_i32 : i32
  }
  func.func @transform_1(%arg0: i32) -> i32 {
    %c0_i32 = arith.constant 0 : i32
    %c0_i32_0 = arith.constant 0 : i32
    return %c0_i32 : i32
  }
  func.func @transform_2(%arg0: i32) -> (i32, i32) {
    %c0_i32 = arith.constant 0 : i32
    %c0_i32_0 = arith.constant 0 : i32
    return %arg0, %c0_i32 : i32, i32
  }
  func.func @transform_3(%arg0: i32) -> (i32, i32) {
    %c0_i32 = arith.constant 0 : i32
    %c0_i32_0 = arith.constant 0 : i32
    %c0_i32_1 = arith.constant 0 : i32
    return %c0_i32, %c0_i32_0 : i32, i32
  }
  func.func @transform_4(%arg0: i32) -> (i32, i32) {
    %c0_i32 = arith.constant 0 : i32
    %c0_i32_0 = arith.constant 0 : i32
    %c0_i32_1 = arith.constant 0 : i32
    return %c0_i32, %c0_i32_0 : i32, i32
  }
  func.func @transform_5(%arg0: i32) -> (i32, i32) {
    %c0_i32 = arith.constant 0 : i32
    %c0_i32_0 = arith.constant 0 : i32
    return %arg0, %c0_i32 : i32, i32
  }
}

</mosaic_0001>

<llo_original>
// kernel: tpu_custom_call.1
$region0: #{tpu_custom_call.1}
  #allocation0 [shape = 'u32[]', space=smem, size = 0x4, offset = 0x4, fixed_abs, tag = 'smem constant byte address 0x4 - core index']
  #allocation1 [shape = 'u32[144,128]{1,0:T(1,128)}', space=vmem, size = 0x12000, scoped, tag = 'internal scratch']
  #allocation2 [shape = 'f32[1]{0:T(128)S(6)}', space=smem, size = 0x200, scoped, tag = 'scoped memory for tpu_custom_call.1']
  #allocation3 [shape = 's32[1]{0:T(128)S(6)}', space=smem, size = 0x200, scoped, tag = 'scoped memory for tpu_custom_call.1']
  %s0 = inlined_call_operand.<no memory space> [shape: f32[1], index: 0, kind: input, shape index: {}]
  %s1 = inlined_call_operand.<no memory space> [shape: s32[1], index: 1, kind: input, shape index: {}]
  %s2 = inlined_call_operand.hbm [shape: f32[64,256], index: 2, kind: input, shape index: {}]
  %s3 = inlined_call_operand.hbm [shape: f32[256,256], index: 3, kind: input, shape index: {}]
  %s4 = inlined_call_operand.vmem [shape: f32[1,256], index: 4, kind: input, shape index: {}]
  %s5 = inlined_call_operand.hbm [shape: f32[64,256], index: 5, kind: output, shape index: {}]
  %s6 = sld [smem:[#allocation0]]
  $region61: #{tpu_custom_call.1} parent=0
    _
  %s8 = ssub.s32 1, %s6
  %s9 = scalar_select 0, %s8, %s6
  %10 = sst [smem:[#allocation2]] %s0
  %11 = sst [smem:[#allocation3]] %s1
  $region1: #{tpu_custom_call.1} parent=0
    #allocation4 [shape = 'u8[65536]{0}', space=vmem, size = 0x10000, scoped, tag = 'input window, operand 2']
    #allocation5 [shape = 's32[2]{0}', space=sflag, size = 0x8, scoped, tag = 'scoped memory for tpu_custom_call.1']
    #allocation6 [shape = 's32[2]{0}', space=sflag, size = 0x8, scoped, tag = 'scoped memory for tpu_custom_call.1']
    #allocation7 [shape = 'u8[262144]{0}', space=vmem, size = 0x40000, scoped, tag = 'input window, operand 3, single buffered']
    #allocation8 [shape = 's32[1]{0}', space=sflag, size = 0x4, scoped, tag = 'scoped memory for tpu_custom_call.1']
    #allocation9 [shape = 'u8[65536]{0}', space=vmem, size = 0x10000, scoped, tag = 'output window, operand 0']
    %12 = vsyncpa [#allocation5], 0
    %s13 = scalar_lea.sflag [#allocation5], 1
    %14 = vsyncpa %s13, 0
    %15 = vsyncpa [#allocation8], 0
    %16 = vsyncpa [#allocation6], 0
    %s17 = scalar_lea.sflag [#allocation6], 1
    %18 = vsyncpa %s17, 0
    loop: start=0, step=1, limit=4
    $region2: #{tpu_custom_call.1} parent=1 // loop_pre_header
      _
    $region3: #{tpu_custom_call.1} parent=1 // loop_header
      %s20 = sphi 0, %s24
      %p21 = scmp.ge.s32.totalorder %s20, 4
      %s28 = sphi 0, %s28
      %s30 = sphi 0, %s28
      %s31 = sphi 0, %s30
      %s45 = sphi 0, %s31
      %s49 = sphi 0, %s49
      %s51 = sphi 0, %s49
      %s52 = sphi 0, %s51
      %s66 = sphi 0, %s52
      %s72 = sphi 0, %s74
      %s75 = sphi 0, %s72
      %s76 = sphi 0, %s75
      %s92 = sphi 0, %s76
      %s96 = sphi 0, %s96
      %s98 = sphi 0, %s96
      %s99 = sphi 0, %s98
      %s113 = sphi 0, %s99
      %s117 = sphi 0, %s117
      %s119 = sphi 0, %s117
      %s120 = sphi 0, %s119
      %s134 = sphi 0, %s120
      %s140 = sphi 0, %s142
      %s143 = sphi 0, %s140
      %s144 = sphi 0, %s143
      %s160 = sphi 0, %s144
    $region4: #{tpu_custom_call.1} parent=1 // loop_header_branch
      %23 = sbr.rel (%p21) target = $region8
    $region5: #{tpu_custom_call.1} parent=1 // loop_body
      %s25 = ssub.s32 %s20, 1
      %s26 = ssub.s32 %s20, 2
      %s27 = sadd.s32 %s20, 1
      %s29 = sadd.s32 %s28, 1
      %p32 = scmp.eq.s32.totalorder %s20, 1
      %p33 = scmp.ne.s32.totalorder %s28, %s30
      %p34 = scmp.eq.s32.totalorder %s20, 0
      %p35 = por %p33, %p34
      %p36 = scmp.ne.s32.totalorder %s28, %s30
      %p37 = scmp.eq.s32.totalorder %s25, 1
      %p38 = por %p36, %p37
      %p39 = scmp.ne.s32.totalorder %s30, %s31
      %p40 = scmp.eq.s32.totalorder %s25, 0
      %p41 = por %p39, %p40
      %p42 = scmp.ne.s32.totalorder %s30, %s31
      %p43 = scmp.eq.s32.totalorder %s26, 1
      %p44 = por %p42, %p43
      %p46 = scmp.ne.s32.totalorder %s31, %s45
      %p47 = scmp.eq.s32.totalorder %s26, 0
      %p48 = por %p46, %p47
      %s50 = sadd.s32 %s49, 1
      %p53 = scmp.eq.s32.totalorder %s20, 1
      %p54 = scmp.ne.s32.totalorder %s49, %s51
      %p55 = scmp.eq.s32.totalorder %s20, 0
      %p56 = por %p54, %p55
      %p57 = scmp.ne.s32.totalorder %s49, %s51
      %p58 = scmp.eq.s32.totalorder %s25, 1
      %p59 = por %p57, %p58
      %p60 = scmp.ne.s32.totalorder %s51, %s52
      %p61 = scmp.eq.s32.totalorder %s25, 0
      %p62 = por %p60, %p61
      %p63 = scmp.ne.s32.totalorder %s51, %s52
      %p64 = scmp.eq.s32.totalorder %s26, 1
      %p65 = por %p63, %p64
      %p67 = scmp.ne.s32.totalorder %s52, %s66
      %p68 = scmp.eq.s32.totalorder %s26, 0
      %p69 = por %p67, %p68
      %s70 = ssub.s32 %s20, %s27
      %p71 = scmp.eq.s32.totalorder %s70, 0
      %s73 = sadd.s32 %s72, 1
      %s74 = scalar_select %p71, %s72, %s73
      %p77 = pneg %p71
      %p78 = scmp.eq.s32.totalorder %s20, 1
      %p79 = por %p77, %p78
      %p80 = scmp.ne.s32.totalorder %s72, %s75
      %p81 = scmp.eq.s32.totalorder %s20, 0
      %p82 = por %p80, %p81
      %p83 = scmp.ne.s32.totalorder %s72, %s75
      %p84 = scmp.eq.s32.totalorder %s25, 1
      %p85 = por %p83, %p84
      %p86 = scmp.ne.s32.totalorder %s75, %s76
      %p87 = scmp.eq.s32.totalorder %s25, 0
      %p88 = por %p86, %p87
      %p89 = scmp.ne.s32.totalorder %s75, %s76
      %p90 = scmp.eq.s32.totalorder %s26, 1
      %p91 = por %p89, %p90
      %p93 = scmp.ne.s32.totalorder %s76, %s92
      %p94 = scmp.eq.s32.totalorder %s26, 0
      %p95 = por %p93, %p94
      %s97 = sadd.s32 %s96, 1
      %p100 = scmp.eq.s32.totalorder %s20, 1
      %p101 = scmp.ne.s32.totalorder %s96, %s98
      %p102 = scmp.eq.s32.totalorder %s20, 0
      %p103 = por %p101, %p102
      %p104 = scmp.ne.s32.totalorder %s96, %s98
      %p105 = scmp.eq.s32.totalorder %s25, 1
      %p106 = por %p104, %p105
      %p107 = scmp.ne.s32.totalorder %s98, %s99
      %p108 = scmp.eq.s32.totalorder %s25, 0
      %p109 = por %p107, %p108
      %p110 = scmp.ne.s32.totalorder %s98, %s99
      %p111 = scmp.eq.s32.totalorder %s26, 1
      %p112 = por %p110, %p111
      %p114 = scmp.ne.s32.totalorder %s99, %s113
      %p115 = scmp.eq.s32.totalorder %s26, 0
      %p116 = por %p114, %p115
      %s118 = sadd.s32 %s117, 1
      %p121 = scmp.eq.s32.totalorder %s20, 1
      %p122 = scmp.ne.s32.totalorder %s117, %s119
      %p123 = scmp.eq.s32.totalorder %s20, 0
      %p124 = por %p122, %p123
      %p125 = scmp.ne.s32.totalorder %s117, %s119
      %p126 = scmp.eq.s32.totalorder %s25, 1
      %p127 = por %p125, %p126
      %p128 = scmp.ne.s32.totalorder %s119, %s120
      %p129 = scmp.eq.s32.totalorder %s25, 0
      %p130 = por %p128, %p129
      %p131 = scmp.ne.s32.totalorder %s119, %s120
      %p132 = scmp.eq.s32.totalorder %s26, 1
      %p133 = por %p131, %p132
      %p135 = scmp.ne.s32.totalorder %s120, %s134
      %p136 = scmp.eq.s32.totalorder %s26, 0
      %p137 = por %p135, %p136
      %s138 = ssub.s32 %s20, %s27
      %p139 = scmp.eq.s32.totalorder %s138, 0
      %s141 = sadd.s32 %s140, 1
      %s142 = scalar_select %p139, %s140, %s141
      %p145 = pneg %p139
      %p146 = scmp.eq.s32.totalorder %s20, 1
      %p147 = por %p145, %p146
      %p148 = scmp.ne.s32.totalorder %s140, %s143
      %p149 = scmp.eq.s32.totalorder %s20, 0
      %p150 = por %p148, %p149
      %p151 = scmp.ne.s32.totalorder %s140, %s143
      %p152 = scmp.eq.s32.totalorder %s25, 1
      %p153 = por %p151, %p152
      %p154 = scmp.ne.s32.totalorder %s143, %s144
      %p155 = scmp.eq.s32.totalorder %s25, 0
      %p156 = por %p154, %p155
      %p157 = scmp.ne.s32.totalorder %s143, %s144
      %p158 = scmp.eq.s32.totalorder %s26, 1
      %p159 = por %p157, %p158
      %p161 = scmp.ne.s32.totalorder %s144, %s160
      %p162 = scmp.eq.s32.totalorder %s26, 0
      %p163 = por %p161, %p162
      %p164 = scmp.le.s32.totalorder 1, %s20
      %p165 = scmp.lt.s32.totalorder %s20, 3
      %p166 = pnand %p164, %p165
      %p167 = pneg %p166
      // Predicated region
      $region9: #{tpu_custom_call.1} parent=5 // pred_check
        _
      $region10: #{tpu_custom_call.1} parent=5 // pred_check_branch
        %169 = sbr.rel (%p166) target = $region12
      $region11: #{tpu_custom_call.1} parent=5 // pred_region
        %s170 = ssub.s32 %s20, 1
        // Predicated region
        $region13: #{tpu_custom_call.1} parent=11 // pred_check
          %p171 = pneg %p41
        $region14: #{tpu_custom_call.1} parent=11 // pred_check_branch
          %173 = sbr.rel (%p171) target = $region16
        $region15: #{tpu_custom_call.1} parent=11 // pred_region
          _
        $region16: #{tpu_custom_call.1} parent=11 // pred_fallthru
          _
        // Predicated region
        $region17: #{tpu_custom_call.1} parent=11 // pred_check
          %p174 = pneg %p62
        $region18: #{tpu_custom_call.1} parent=11 // pred_check_branch
          %176 = sbr.rel (%p174) target = $region20
        $region19: #{tpu_custom_call.1} parent=11 // pred_region
          _
        $region20: #{tpu_custom_call.1} parent=11 // pred_fallthru
          _
        // Predicated region
        $region21: #{tpu_custom_call.1} parent=11 // pred_check
          %p177 = pneg %p109
        $region22: #{tpu_custom_call.1} parent=11 // pred_check_branch
          %179 = sbr.rel (%p177) target = $region24
        $region23: #{tpu_custom_call.1} parent=11 // pred_region
          %s181 = ssub.s32 8192, 8192
          %182 = vsyncadd [#allocation8], %s181
          %s183 = sshll.u32 [#allocation7], 4
          %s184 = int_to_ptr.vmem [resolvable:$true] %s183
          %189 = dma.hbm_to_vmem [thread:$0]  %s3, 8192, %s184, [#allocation8], 256, 256, 16
        $region24: #{tpu_custom_call.1} parent=11 // pred_fallthru
          _
        // Predicated region
        $region25: #{tpu_custom_call.1} parent=11 // pred_check
          %p190 = pneg %p130
        $region26: #{tpu_custom_call.1} parent=11 // pred_check_branch
          %192 = sbr.rel (%p190) target = $region28
        $region27: #{tpu_custom_call.1} parent=11 // pred_region
          _
        $region28: #{tpu_custom_call.1} parent=11 // pred_fallthru
          _
      $region12: #{tpu_custom_call.1} parent=5 // pred_fallthru
        _
      %p193 = scmp.lt.s32.totalorder %s20, 2
      // Predicated region
      $region29: #{tpu_custom_call.1} parent=5 // pred_check
        %p194 = pneg %p193
      $region30: #{tpu_custom_call.1} parent=5 // pred_check_branch
        %196 = sbr.rel (%p194) target = $region32
      $region31: #{tpu_custom_call.1} parent=5 // pred_region
        // Predicated region
        $region33: #{tpu_custom_call.1} parent=31 // pred_check
          %p197 = pneg %p82
        $region34: #{tpu_custom_call.1} parent=31 // pred_check_branch
          %199 = sbr.rel (%p197) target = $region36
        $region35: #{tpu_custom_call.1} parent=31 // pred_region
          %s200 = sand.u32 %s72, 1
          %s201 = scalar_lea.sflag [#allocation5], %s200
          %s202 = sand.u32 %s72, 1
          %s203 = smul.addr %s202, 64
          %s204 = scalar_lea.vmem [#allocation4], %s203
          %s205 = smul.u32 4, %s20
          %s207 = ssub.s32 1024, 1024
          %208 = vsyncadd %s201, %s207
          %s209 = smul.addr %s205, 2
          %s210 = smul.addr %s209, 128
          %s211 = scalar_lea.hbm %s2, %s210
          %s212 = sshll.u32 %s204, 4
          %s213 = int_to_ptr.vmem [resolvable:$true] %s212
          %218 = dma.hbm_to_vmem [thread:$0]  %s211, 1024, %s213, %s201, 256, 256, 16
        $region36: #{tpu_custom_call.1} parent=31 // pred_fallthru
          _
      $region32: #{tpu_custom_call.1} parent=5 // pred_fallthru
        _
      %p219 = scmp.le.s32.totalorder 1, %s20
      %p220 = scmp.lt.s32.totalorder %s20, 3
      %p221 = pnand %p219, %p220
      %p222 = pneg %p221
      // Predicated region
      $region37: #{tpu_custom_call.1} parent=5 // pred_check
        _
      $region38: #{tpu_custom_call.1} parent=5 // pred_check_branch
        %224 = sbr.rel (%p221) target = $region40
      $region39: #{tpu_custom_call.1} parent=5 // pred_region
        %s225 = ssub.s32 %s20, 1
        %s226 = sand.u32 %s75, 1
        %s227 = scalar_lea.sflag [#allocation5], %s226
        %s228 = sand.u32 %s75, 1
        %s229 = smul.addr %s228, 64
        %s230 = scalar_lea.vmem [#allocation4], %s229
        // Predicated region
        $region41: #{tpu_custom_call.1} parent=39 // pred_check
          %p231 = pneg %p88
        $region42: #{tpu_custom_call.1} parent=39 // pred_check_branch
          %233 = sbr.rel (%p231) target = $region44
        $region43: #{tpu_custom_call.1} parent=39 // pred_region
          %234 = dma.done %s227, 1024
        $region44: #{tpu_custom_call.1} parent=39 // pred_fallthru
          _
        // Predicated region
        $region45: #{tpu_custom_call.1} parent=39 // pred_check
          %p235 = pneg %p109
        $region46: #{tpu_custom_call.1} parent=39 // pred_check_branch
          %237 = sbr.rel (%p235) target = $region48
        $region47: #{tpu_custom_call.1} parent=39 // pred_region
          %238 = dma.done [#allocation8], 8192
        $region48: #{tpu_custom_call.1} parent=39 // pred_fallthru
          _
        %p239 = pneg %p41
        %p240 = pneg %p38
        %p241 = pneg %p62
        %p242 = pneg %p59
        %s243 = sand.u32 %s75, 1
        %s244 = scalar_lea.sflag [#allocation5], %s243
        %s245 = sand.u32 %s75, 1
        %s246 = smul.addr %s245, 64
        %s247 = scalar_lea.vmem [#allocation4], %s246
        %p248 = pneg %p88
        %p249 = pneg %p85
        %p250 = pneg %p109
        %p251 = pneg %p106
        %p252 = pneg %p130
        %p253 = pneg %p127
        %p254 = pneg %p156
        %p255 = pneg %p153
        %s256 = sand.u32 %s143, 1
        %s257 = scalar_lea.sflag [#allocation6], %s256
        %s258 = sand.u32 %s143, 1
        %s259 = smul.addr %s258, 64
        %s260 = scalar_lea.vmem [#allocation9], %s259
        %s261 = smul.u32 4, %s25
        %s262 = smul.u32 4, %s25
        %v263 = vld [vmem:[%s230] sm:$0xff]
        %v264 = vld [vmem:[%s230 + $0x8] sm:$0xff]
        %v265 = vld [vmem:[%s230 + $0x10] sm:$0xff]
        %v266 = vld [vmem:[%s230 + $0x18] sm:$0xff]
        %v267 = vld [vmem:[%s230 + $0x20] sm:$0xff]
        %v268 = vld [vmem:[%s230 + $0x28] sm:$0xff]
        %v269 = vld [vmem:[%s230 + $0x30] sm:$0xff]
        %v270 = vld [vmem:[%s230 + $0x38] sm:$0xff]
        %v271 = vpack.c.bf16 %v265, %v263
        %v272 = vpack.c.bf16 %v266, %v264
        %v273 = vpack.c.bf16 %v269, %v267
        %v274 = vpack.c.bf16 %v270, %v268
        %v275 = vld [vmem:[#allocation7] sm:$0xff]
        %v276 = vld [vmem:[#allocation7 + $0x8] sm:$0xff]
        %v277 = vld [vmem:[#allocation7 + $0x10] sm:$0xff]
        %v278 = vld [vmem:[#allocation7 + $0x18] sm:$0xff]
        %v279 = vld [vmem:[#allocation7 + $0x20] sm:$0xff]
        %v280 = vld [vmem:[#allocation7 + $0x28] sm:$0xff]
        %v281 = vld [vmem:[#allocation7 + $0x30] sm:$0xff]
        %v282 = vld [vmem:[#allocation7 + $0x38] sm:$0xff]
        %v283 = vld [vmem:[#allocation7 + $0x40] sm:$0xff]
        %v284 = vld [vmem:[#allocation7 + $0x48] sm:$0xff]
        %v285 = vld [vmem:[#allocation7 + $0x50] sm:$0xff]
        %v286 = vld [vmem:[#allocation7 + $0x58] sm:$0xff]
        %v287 = vld [vmem:[#allocation7 + $0x60] sm:$0xff]
        %v288 = vld [vmem:[#allocation7 + $0x68] sm:$0xff]
        %v289 = vld [vmem:[#allocation7 + $0x70] sm:$0xff]
        %v290 = vld [vmem:[#allocation7 + $0x78] sm:$0xff]
        %v291 = vld [vmem:[#allocation7 + $0x80] sm:$0xff]
        %v292 = vld [vmem:[#allocation7 + $0x88] sm:$0xff]
        %v293 = vld [vmem:[#allocation7 + $0x90] sm:$0xff]
        %v294 = vld [vmem:[#allocation7 + $0x98] sm:$0xff]
        %v295 = vld [vmem:[#allocation7 + $0xa0] sm:$0xff]
        %v296 = vld [vmem:[#allocation7 + $0xa8] sm:$0xff]
        %v297 = vld [vmem:[#allocation7 + $0xb0] sm:$0xff]
        %v298 = vld [vmem:[#allocation7 + $0xb8] sm:$0xff]
        %v299 = vld [vmem:[#allocation7 + $0xc0] sm:$0xff]
        %v300 = vld [vmem:[#allocation7 + $0xc8] sm:$0xff]
        %v301 = vld [vmem:[#allocation7 + $0xd0] sm:$0xff]
        %v302 = vld [vmem:[#allocation7 + $0xd8] sm:$0xff]
        %v303 = vld [vmem:[#allocation7 + $0xe0] sm:$0xff]
        %v304 = vld [vmem:[#allocation7 + $0xe8] sm:$0xff]
        %v305 = vld [vmem:[#allocation7 + $0xf0] sm:$0xff]
        %v306 = vld [vmem:[#allocation7 + $0xf8] sm:$0xff]
        %v307 = vld [vmem:[#allocation7 + $0x100] sm:$0xff]
        %v308 = vld [vmem:[#allocation7 + $0x108] sm:$0xff]
        %v309 = vld [vmem:[#allocation7 + $0x110] sm:$0xff]
        %v310 = vld [vmem:[#allocation7 + $0x118] sm:$0xff]
        %v311 = vld [vmem:[#allocation7 + $0x120] sm:$0xff]
        %v312 = vld [vmem:[#allocation7 + $0x128] sm:$0xff]
        %v313 = vld [vmem:[#allocation7 + $0x130] sm:$0xff]
        %v314 = vld [vmem:[#allocation7 + $0x138] sm:$0xff]
        %v315 = vld [vmem:[#allocation7 + $0x140] sm:$0xff]
        %v316 = vld [vmem:[#allocation7 + $0x148] sm:$0xff]
        %v317 = vld [vmem:[#allocation7 + $0x150] sm:$0xff]
        %v318 = vld [vmem:[#allocation7 + $0x158] sm:$0xff]
        %v319 = vld [vmem:[#allocation7 + $0x160] sm:$0xff]
        %v320 = vld [vmem:[#allocation7 + $0x168] sm:$0xff]
        %v321 = vld [vmem:[#allocation7 + $0x170] sm:$0xff]
        %v322 = vld [vmem:[#allocation7 + $0x178] sm:$0xff]
        %v323 = vld [vmem:[#allocation7 + $0x180] sm:$0xff]
        %v324 = vld [vmem:[#allocation7 + $0x188] sm:$0xff]
        %v325 = vld [vmem:[#allocation7 + $0x190] sm:$0xff]
        %v326 = vld [vmem:[#allocation7 + $0x198] sm:$0xff]
        %v327 = vld [vmem:[#allocation7 + $0x1a0] sm:$0xff]
        %v328 = vld [vmem:[#allocation7 + $0x1a8] sm:$0xff]
        %v329 = vld [vmem:[#allocation7 + $0x1b0] sm:$0xff]
        %v330 = vld [vmem:[#allocation7 + $0x1b8] sm:$0xff]
        %v331 = vld [vmem:[#allocation7 + $0x1c0] sm:$0xff]
        %v332 = vld [vmem:[#allocation7 + $0x1c8] sm:$0xff]
        %v333 = vld [vmem:[#allocation7 + $0x1d0] sm:$0xff]
        %v334 = vld [vmem:[#allocation7 + $0x1d8] sm:$0xff]
        %v335 = vld [vmem:[#allocation7 + $0x1e0] sm:$0xff]
        %v336 = vld [vmem:[#allocation7 + $0x1e8] sm:$0xff]
        %v337 = vld [vmem:[#allocation7 + $0x1f0] sm:$0xff]
        %v338 = vld [vmem:[#allocation7 + $0x1f8] sm:$0xff]
        %v339 = vpack.c.bf16 %v277, %v275
        %v340 = vpack.c.bf16 %v278, %v276
        %v341 = vpack.c.bf16 %v281, %v279
        %v342 = vpack.c.bf16 %v282, %v280
        %v343 = vpack.c.bf16 %v285, %v283
        %v344 = vpack.c.bf16 %v286, %v284
        %v345 = vpack.c.bf16 %v289, %v287
        %v346 = vpack.c.bf16 %v290, %v288
        %v347 = vpack.c.bf16 %v293, %v291
        %v348 = vpack.c.bf16 %v294, %v292
        %v349 = vpack.c.bf16 %v297, %v295
        %v350 = vpack.c.bf16 %v298, %v296
        %v351 = vpack.c.bf16 %v301, %v299
        %v352 = vpack.c.bf16 %v302, %v300
        %v353 = vpack.c.bf16 %v305, %v303
        %v354 = vpack.c.bf16 %v306, %v304
        %v355 = vpack.c.bf16 %v309, %v307
        %v356 = vpack.c.bf16 %v310, %v308
        %v357 = vpack.c.bf16 %v313, %v311
        %v358 = vpack.c.bf16 %v314, %v312
        %v359 = vpack.c.bf16 %v317, %v315
        %v360 = vpack.c.bf16 %v318, %v316
        %v361 = vpack.c.bf16 %v321, %v319
        %v362 = vpack.c.bf16 %v322, %v320
        %v363 = vpack.c.bf16 %v325, %v323
        %v364 = vpack.c.bf16 %v326, %v324
        %v365 = vpack.c.bf16 %v329, %v327
        %v366 = vpack.c.bf16 %v330, %v328
        %v367 = vpack.c.bf16 %v333, %v331
        %v368 = vpack.c.bf16 %v334, %v332
        %v369 = vpack.c.bf16 %v337, %v335
        %v370 = vpack.c.bf16 %v338, %v336
        %v371 = vld [vmem:[%s4] sm:$0x3]
        %v373 = vlaneseq
        %v374 = vshrl.u32 %v373, 7
        %v375 = vsub.s32 0, %v374
        %v376 = vrot.slane %v371, %v375
        %v377 = vlaneseq
        %v378 = vshrl.u32 %v377, 7
        %v379 = vsub.s32 1, %v378
        %v380 = vrot.slane %v371, %v379
        %383 = vmatprep.subr.bf16.mxu0 %v340
        %384 = vmatpush1.bf16.msra.mxu0 %v339
        %385 = vmatprep.subr.bf16.mxu0 %v342
        %386 = vmatpush1.bf16.msra.mxu0 %v341
        %387 = vmatprep.subr.bf16.mxu0 %v344
        %388 = vmatpush1.bf16.msra.mxu0 %v343
        %389 = vmatprep.subr.bf16.mxu0 %v346
        %390 = vmatpush1.bf16.msra.mxu0 %v345
        %391 = vmatprep.subr.bf16.mxu0 %v348
        %392 = vmatpush1.bf16.msra.mxu0 %v347
        %393 = vmatprep.subr.bf16.mxu0 %v350
        %394 = vmatpush1.bf16.msra.mxu0 %v349
        %395 = vmatprep.subr.bf16.mxu0 %v352
        %396 = vmatpush1.bf16.msra.mxu0 %v351
        %397 = vmatprep.subr.bf16.mxu0 %v354
        %398 = vmatpush1.bf16.msra.mxu0 %v353
        %399 = vmatprep.subr.bf16.mxu0 %v356
        %400 = vmatpush1.bf16.msra.mxu0 %v355
        %401 = vmatprep.subr.bf16.mxu0 %v358
        %402 = vmatpush1.bf16.msra.mxu0 %v357
        %403 = vmatprep.subr.bf16.mxu0 %v360
        %404 = vmatpush1.bf16.msra.mxu0 %v359
        %405 = vmatprep.subr.bf16.mxu0 %v362
        %406 = vmatpush1.bf16.msra.mxu0 %v361
        %407 = vmatprep.subr.bf16.mxu0 %v364
        %408 = vmatpush1.bf16.msra.mxu0 %v363
        %409 = vmatprep.subr.bf16.mxu0 %v366
        %410 = vmatpush1.bf16.msra.mxu0 %v365
        %411 = vmatprep.subr.bf16.mxu0 %v368
        %412 = vmatpush1.bf16.msra.mxu0 %v367
        %413 = vmatprep.subr.bf16.mxu0 %v370
        %414 = vmatpush1.bf16.msra.mxu0 %v369
        %415 = vmatprep.mubr.bf16.mxu0 %v272
        %416 = vmatmul.mubr.bf16.gmra.mrb[0].mxu0 %v271
        %v417 = vpop.f32.mrb[0].mxu0
        %v418 = vadd.f32 %v376, %v417
        %v419 = vpop.f32.mrb[0].mxu0
        %v420 = vadd.f32 %v380, %v419
        %v421 = vpop.f32.mrb[0].mxu0
        %v422 = vadd.f32 %v376, %v421
        %v423 = vpop.f32.mrb[0].mxu0
        %v424 = vadd.f32 %v380, %v423
        %425 = vmatprep.mubr.bf16.mxu0 %v274
        %426 = vmatmul.mubr.bf16.gmra.mrb[0].mxu0 %v273
        %v427 = vpop.f32.mrb[0].mxu0
        %v428 = vadd.f32 %v376, %v427
        %v429 = vpop.f32.mrb[0].mxu0
        %v430 = vadd.f32 %v380, %v429
        %v431 = vpop.f32.mrb[0].mxu0
        %v432 = vadd.f32 %v376, %v431
        %v433 = vpop.f32.mrb[0].mxu0
        %v434 = vadd.f32 %v380, %v433
        %435 = vdwg.mxu0
        %s436 = sld [smem:[#allocation2]]
        %s437 = sld [smem:[#allocation3]]
        %s438 = smul.u32 %s25, 32
        %vm439 = vcmp.ge.f32.partialorder %v418, 0.0
        %vm440 = vcmp.ge.f32.partialorder %v420, 0.0
        %vm441 = vcmp.ge.f32.partialorder %v422, 0.0
        %vm442 = vcmp.ge.f32.partialorder %v424, 0.0
        %vm443 = vcmp.ge.f32.partialorder %v428, 0.0
        %vm444 = vcmp.ge.f32.partialorder %v430, 0.0
        %vm445 = vcmp.ge.f32.partialorder %v432, 0.0
        %vm446 = vcmp.ge.f32.partialorder %v434, 0.0
        %v447 = vstv %s436
        %v448 = vmul.f32 %v447, %v418
        %v449 = vmul.f32 %v447, %v420
        %v450 = vmul.f32 %v447, %v422
        %v451 = vmul.f32 %v447, %v424
        %v452 = vmul.f32 %v447, %v428
        %v453 = vmul.f32 %v447, %v430
        %v454 = vmul.f32 %v447, %v432
        %v455 = vmul.f32 %v447, %v434
        %v456 = vsel %vm439, %v418, %v448
        %v457 = vsel %vm440, %v420, %v449
        %v458 = vsel %vm441, %v422, %v450
        %v459 = vsel %vm442, %v424, %v451
        %v460 = vsel %vm443, %v428, %v452
        %v461 = vsel %vm444, %v430, %v453
        %v462 = vsel %vm445, %v432, %v454
        %v463 = vsel %vm446, %v434, %v455
        %v464 = vlaneseq
        %v465 = vshrl.u32 %v464, 7
        %v466 = vadd.s32 %v465, 8
        %v467 = vadd.s32 %v465, 16
        %v468 = vadd.s32 %v465, 24
        %v469 = vstv %s438
        %v470 = vadd.s32 %v465, %v469
        %v471 = vadd.s32 %v466, %v469
        %v472 = vadd.s32 %v467, %v469
        %v473 = vadd.s32 %v468, %v469
        %v474 = vlaneseq
        %v475 = vand.u32 %v474, 127
        %v476 = vadd.s32 %v475, 128
        %v477 = vmul.u32 %v470, 256
        %v478 = vmul.u32 %v471, 256
        %v479 = vmul.u32 %v472, 256
        %v480 = vmul.u32 %v473, 256
        %v481 = vadd.s32 %v477, %v475
        %v482 = vadd.s32 %v477, %v476
        %v483 = vadd.s32 %v478, %v475
        %v484 = vadd.s32 %v478, %v476
        %v485 = vadd.s32 %v479, %v475
        %v486 = vadd.s32 %v479, %v476
        %v487 = vadd.s32 %v480, %v475
        %v488 = vadd.s32 %v480, %v476
        %v489 = vstv %s437
        %v490 = vxor.u32 %v481, %v489
        %v491 = vxor.u32 %v482, %v489
        %v492 = vxor.u32 %v483, %v489
        %v493 = vxor.u32 %v484, %v489
        %v494 = vxor.u32 %v485, %v489
        %v495 = vxor.u32 %v486, %v489
        %v496 = vxor.u32 %v487, %v489
        %v497 = vxor.u32 %v488, %v489
        %v498 = vmul.u32 %v490, 2654435761
        %v499 = vmul.u32 %v491, 2654435761
        %v500 = vmul.u32 %v492, 2654435761
        %v501 = vmul.u32 %v493, 2654435761
        %v502 = vmul.u32 %v494, 2654435761
        %v503 = vmul.u32 %v495, 2654435761
        %v504 = vmul.u32 %v496, 2654435761
        %v505 = vmul.u32 %v497, 2654435761
        %v506 = vshrl.u32 %v498, 16
        %v507 = vshrl.u32 %v499, 16
        %v508 = vshrl.u32 %v500, 16
        %v509 = vshrl.u32 %v501, 16
        %v510 = vshrl.u32 %v502, 16
        %v511 = vshrl.u32 %v503, 16
        %v512 = vshrl.u32 %v504, 16
        %v513 = vshrl.u32 %v505, 16
        %v514 = vxor.u32 %v498, %v506
        %v515 = vxor.u32 %v499, %v507
        %v516 = vxor.u32 %v500, %v508
        %v517 = vxor.u32 %v501, %v509
        %v518 = vxor.u32 %v502, %v510
        %v519 = vxor.u32 %v503, %v511
        %v520 = vxor.u32 %v504, %v512
        %v521 = vxor.u32 %v505, %v513
        %v522 = vmul.u32 %v514, 2246822507
        %v523 = vmul.u32 %v515, 2246822507
        %v524 = vmul.u32 %v516, 2246822507
        %v525 = vmul.u32 %v517, 2246822507
        %v526 = vmul.u32 %v518, 2246822507
        %v527 = vmul.u32 %v519, 2246822507
        %v528 = vmul.u32 %v520, 2246822507
        %v529 = vmul.u32 %v521, 2246822507
        %v530 = vshrl.u32 %v522, 16
        %v531 = vshrl.u32 %v523, 16
        %v532 = vshrl.u32 %v524, 16
        %v533 = vshrl.u32 %v525, 16
        %v534 = vshrl.u32 %v526, 16
        %v535 = vshrl.u32 %v527, 16
        %v536 = vshrl.u32 %v528, 16
        %v537 = vshrl.u32 %v529, 16
        %v538 = vxor.u32 %v522, %v530
        %v539 = vxor.u32 %v523, %v531
        %v540 = vxor.u32 %v524, %v532
        %v541 = vxor.u32 %v525, %v533
        %v542 = vxor.u32 %v526, %v534
        %v543 = vxor.u32 %v527, %v535
        %v544 = vxor.u32 %v528, %v536
        %v545 = vxor.u32 %v529, %v537
        %vm546 = vcmp.ge.u32.totalorder %v538, 858993459
        %vm547 = vcmp.ge.u32.totalorder %v539, 858993459
        %vm548 = vcmp.ge.u32.totalorder %v540, 858993459
        %vm549 = vcmp.ge.u32.totalorder %v541, 858993459
        %vm550 = vcmp.ge.u32.totalorder %v542, 858993459
        %vm551 = vcmp.ge.u32.totalorder %v543, 858993459
        %vm552 = vcmp.ge.u32.totalorder %v544, 858993459
        %vm553 = vcmp.ge.u32.totalorder %v545, 858993459
        %v554 = vsel %vm546, 1.25, 0.0
        %v555 = vsel %vm547, 1.25, 0.0
        %v556 = vsel %vm548, 1.25, 0.0
        %v557 = vsel %vm549, 1.25, 0.0
        %v558 = vsel %vm550, 1.25, 0.0
        %v559 = vsel %vm551, 1.25, 0.0
        %v560 = vsel %vm552, 1.25, 0.0
        %v561 = vsel %vm553, 1.25, 0.0
        %v562 = vmul.f32 %v456, %v554
        %v563 = vmul.f32 %v457, %v555
        %v564 = vmul.f32 %v458, %v556
        %v565 = vmul.f32 %v459, %v557
        %v566 = vmul.f32 %v460, %v558
        %v567 = vmul.f32 %v461, %v559
        %v568 = vmul.f32 %v462, %v560
        %v569 = vmul.f32 %v463, %v561
        %570 = vst [vmem:[%s260] sm:$0xff] %v562
        %571 = vst [vmem:[%s260 + $0x8] sm:$0xff] %v563
        %572 = vst [vmem:[%s260 + $0x10] sm:$0xff] %v564
        %573 = vst [vmem:[%s260 + $0x18] sm:$0xff] %v565
        %574 = vst [vmem:[%s260 + $0x20] sm:$0xff] %v566
        %575 = vst [vmem:[%s260 + $0x28] sm:$0xff] %v567
        %576 = vst [vmem:[%s260 + $0x30] sm:$0xff] %v568
        %577 = vst [vmem:[%s260 + $0x38] sm:$0xff] %v569
        %s578 = sand.u32 %s143, 1
        %s579 = scalar_lea.sflag [#allocation6], %s578
        %s580 = sand.u32 %s143, 1
        %s581 = smul.addr %s580, 64
        %s582 = scalar_lea.vmem [#allocation9], %s581
        // Predicated region
        $region49: #{tpu_custom_call.1} parent=39 // pred_check
          %p583 = pneg %p153
        $region50: #{tpu_custom_call.1} parent=39 // pred_check_branch
          %585 = sbr.rel (%p583) target = $region52
        $region51: #{tpu_custom_call.1} parent=39 // pred_region
          %s586 = smul.u32 4, %s25
          %s588 = ssub.s32 1024, 1024
          %589 = vsyncadd %s579, %s588
          %s590 = smul.addr %s586, 2
          %s591 = smul.addr %s590, 128
          %s592 = scalar_lea.hbm %s5, %s591
          %s593 = sshll.u32 %s582, 4
          %s594 = int_to_ptr.vmem [resolvable:$true] %s593
          %599 = dma.vmem_to_hbm [thread:$0]  %s594, 1024, %s592, %s579, 256, 256, 16
        $region52: #{tpu_custom_call.1} parent=39 // pred_fallthru
          _
      $region40: #{tpu_custom_call.1} parent=5 // pred_fallthru
        _
      %p600 = scmp.le.s32.totalorder 2, %s20
      // Predicated region
      $region53: #{tpu_custom_call.1} parent=5 // pred_check
        %p601 = pneg %p600
      $region54: #{tpu_custom_call.1} parent=5 // pred_check_branch
        %603 = sbr.rel (%p601) target = $region56
      $region55: #{tpu_custom_call.1} parent=5 // pred_region
        %s604 = ssub.s32 %s20, 2
        // Predicated region
        $region57: #{tpu_custom_call.1} parent=55 // pred_check
          %p605 = pneg %p159
        $region58: #{tpu_custom_call.1} parent=55 // pred_check_branch
          %607 = sbr.rel (%p605) target = $region60
        $region59: #{tpu_custom_call.1} parent=55 // pred_region
          %s608 = sand.u32 %s144, 1
          %s609 = scalar_lea.sflag [#allocation6], %s608
          %s610 = sand.u32 %s144, 1
          %s611 = smul.addr %s610, 64
          %s612 = scalar_lea.vmem [#allocation9], %s611
          %613 = dma.done %s609, 1024
        $region60: #{tpu_custom_call.1} parent=55 // pred_fallthru
          _
      $region56: #{tpu_custom_call.1} parent=5 // pred_fallthru
        _
    $region6: #{tpu_custom_call.1} parent=1 // loop_footer
      %s24 = sadd.s32 1, %s20
    $region7: #{tpu_custom_call.1} parent=1 // loop_footer_branch
      %19 = sbr.rel target = $region3
    $region8: #{tpu_custom_call.1} parent=1 // loop_exit
      _
    %614 = vsyncpa [#allocation5], 1
    %s615 = scalar_lea.sflag [#allocation5], 1
    %616 = vsyncpa %s615, 1
    %617 = vsyncpa [#allocation8], 1
    %618 = vsyncpa [#allocation6], 1
    %s619 = scalar_lea.sflag [#allocation6], 1
    %620 = vsyncpa %s619, 1

</llo_original>
